<compile_context>
chip_gen: v7x
topology: tpu7x:2x2x1
jax: 0.10.0
libtpu: 0.0.40
codegen_flags: <defaults>
</compile_context>

<pallas_src>
import jax
import jax.numpy as jnp
from jax.experimental import pallas as pl
from jax.experimental.pallas import tpu as pltpu

EPS = 1e-5
LANE = 128
TILE_ROWS = 8                      # output rows per conv grid step
_VMEM_LIMIT = 32 * 1024 * 1024     # safe on v5e/v6e (128 MiB) and v7x (64 MiB physical)


def _cdiv(a, b):
    return -(-a // b)


def _round_up(a, b):
    return _cdiv(a, b) * b


def _pad_last(a, size):
    pad = size - a.shape[-1]
    if pad == 0:
        return a
    return jnp.pad(a, [(0, 0)] * (a.ndim - 1) + [(0, pad)])


# ----------------------- BN statistics (network-block input only) -----------------------

def _bn_stats_kernel(x_ref, stat_ref):
    xs = x_ref[0].astype(jnp.float32)                        # (rows, C)
    s = jnp.sum(xs, axis=0, keepdims=True)                   # (1, C)
    ss = jnp.sum(xs * xs, axis=0, keepdims=True)             # (1, C)
    stat_ref[0] = jnp.concatenate([s, ss], axis=0)           # (2, C)


def bn_stats(x):
    """Per-channel sum / sum-of-squares of an NHWC activation (f32 partials, parallel grid)."""
    n, h, w, c = x.shape
    rows = h * w
    x3 = x.reshape(n, rows, c)
    stats = pl.pallas_call(
        _bn_stats_kernel,
        out_shape=jax.ShapeDtypeStruct((n, 2, c), jnp.float32),
        grid=(n,),
        in_specs=[pl.BlockSpec((1, rows, c), lambda i: (i, 0, 0))],
        out_specs=pl.BlockSpec((1, 2, c), lambda i: (i, 0, 0)),
        compiler_params=pltpu.CompilerParams(
            dimension_semantics=("parallel",),
            vmem_limit_bytes=_VMEM_LIMIT),
    )(x3)
    return stats[:, 0, :].sum(axis=0), stats[:, 1, :].sum(axis=0)


def bn_scale_bias(sums, ssqs, count, gamma, beta):
    """Fold training-mode BatchNorm into per-channel scale/bias (f32)."""
    # TODO(synk): E[x^2]-E[x]^2 can cancel for large-mean activations; a shifted two-pass
    # reduction would be more robust if BN-stat precision ever matters.
    mean = sums / count
    var = jnp.maximum(ssqs / count - mean * mean, 0.0)
    scale = gamma * jax.lax.rsqrt(var + EPS)
    bias = beta - mean * scale
    return scale.reshape(1, -1), bias.reshape(1, -1)


# ------------------ fused BN+ReLU + conv3x3 (+shortcut, +residual, +stats) --------------

def _make_conv_kernel(s, th, nj, wr, wo, h, ho, cin, cout, has_shortcut, has_residual):
    r_total = s * th + 3 - s                  # halo rows handled per grid step
    scr_rows = (th + 3) * wr                  # flat rows per parity plane of the scratch

    def kernel(*refs):
        i = 0
        x_main = refs[i]; i += 1
        halos = [refs[i + k] for k in range(3 - s)]; i += 3 - s
        sc_ref = refs[i]; i += 1
        bs_ref = refs[i]; i += 1
        w_ref = refs[i]; i += 1
        ws_ref = None
        if has_shortcut:
            ws_ref = refs[i]; i += 1
        res_ref = None
        if has_residual:
            res_ref = refs[i]; i += 1
        o_ref = refs[i]; i += 1
        short_ref = None
        if has_shortcut:
            short_ref = refs[i]; i += 1
        stat_ref = refs[i]; i += 1
        a_scr = refs[i]; i += 1

        j = pl.program_id(1)
        g0 = s * th * j                        # padded input row of halo row 0
        sc2d = sc_ref[...]                     # (wr, s*cin) f32, zero at conv-pad columns
        bs2d = bs_ref[...]

        # ---- normalize the halo ONCE into the parity-split bf16 scratch ----
        for r in range(r_total):
            if r < s * th:
                row = x_main[0, r, :, :]
            else:
                row = halos[r - s * th][0, 0, :, :]
            a = jnp.maximum(row.astype(jnp.float32) * sc2d + bs2d, 0.0)
            need_top = (r == 0)                                   # padded row 0 (only j==0)
            need_bot = (s * th * (nj - 1) + r > h)                # possible bottom pad row
            if need_top or need_bot:
                g = g0 + r
                if need_top and need_bot:
                    ok = jnp.logical_and(g >= 1, g <= h)
                elif need_top:
                    ok = g >= 1
                else:
                    ok = g <= h
                a = a * ok.astype(jnp.float32)
            a_scr[r % s, pl.ds((r // s) * wr, wr), :] = a.astype(jnp.bfloat16)
        # zero the tiny unwritten tail of each parity plane (keeps OOB-adjacent reads
        # deterministic; those values only ever land in discarded output columns)
        for p in range(s):
            written = _cdiv(r_total - p, s) * wr
            a_scr[p, pl.ds(written, scr_rows - written), :] = jnp.zeros(
                (scr_rows - written, s * cin), jnp.bfloat16)

        # ---- 9 accumulating big-M (th*wr, cin) @ (cin, cout) MXU matmuls ----
        acc = None
        sh = None
        for kh in range(3):
            u0, q_r = kh // s, kh % s
            for kw in range(3):
                c0, q_c = kw // s, kw % s
                a_tap = a_scr[q_r, pl.ds(u0 * wr + c0, th * wr),
                              pl.ds(q_c * cin, cin)]
                d = jnp.dot(a_tap, w_ref[kh, kw],
                            preferred_element_type=jnp.float32)
                acc = d if acc is None else acc + d
                if has_shortcut and kh == 1 and kw == 1:
                    # fused 1x1 strided shortcut: same normalized tap, different weights
                    sh = jnp.dot(a_tap, ws_ref[...],
                                 preferred_element_type=jnp.float32)

        out = acc.reshape(th, wr, cout)[:, :wo, :]                 # (th, wo, cout) f32
        if ho % th != 0:                                           # mask padded output rows
            t = jax.lax.broadcasted_iota(jnp.int32, (th, 1, 1), 0)
            out = jnp.where(th * j + t < ho, out, 0.0)
        if has_shortcut:
            sh = sh.reshape(th, wr, cout)[:, :wo, :]
            short_ref[0] = sh.astype(short_ref.dtype)
        if has_residual:
            out = out + res_ref[0].astype(jnp.float32)             # fused residual add
        o_ref[0] = out.astype(o_ref.dtype)

        # fused per-channel partial sums for the NEXT BatchNorm (f32)
        csum = jnp.sum(jnp.sum(out, axis=0), axis=0, keepdims=True)        # (1, cout)
        cssq = jnp.sum(jnp.sum(out * out, axis=0), axis=0, keepdims=True)  # (1, cout)
        stat_ref[0, 0] = jnp.concatenate([csum, cssq], axis=0)

    return kernel


def conv3x3_bn_relu(x, scale, bias, w_bf16, stride, *, shortcut_w=None,
                    residual=None, th=TILE_ROWS):
    """3x3 conv (pad=1, bias=False) with the preceding BN+ReLU fused into its input path.

    Optionally fuses a strided 1x1 shortcut conv (second output), a residual add, and
    always emits per-channel sum / sum-of-squares of the result for the next BN.
    Channels must already be lane-padded (multiples of 128).
    Returns (out_bf16, shortcut_bf16_or_None, sums_f32, ssqs_f32).
    """
    n, h, w, cin = x.shape
    cout = w_bf16.shape[-1]
    s = stride
    ho = (h - 1) // s + 1
    wo = (w - 1) // s + 1
    th = min(th, ho)
    nj = _cdiv(ho, th)
    ho_p = nj * th
    wr = _round_up(_cdiv(w + 2, s), 8)        # lane-folded width, sublane aligned
    wcols = wr * s
    hp = s * th * nj + 3 - s
    # Single spatial pad of the conv input (halo + alignment zeros).
    # TODO(synk): fold this pad into the producing kernel to save one HBM pass.
    xp = jnp.pad(x, ((0, 0), (1, hp - h - 1), (1, wcols - w - 1), (0, 0)))
    xr = xp.reshape(n, hp, wr, s * cin)       # column stride folded into the lane axis

    # 2-D scale/bias with the conv zero-padding mask baked in (zero at pad columns).
    rcol = jnp.arange(wr, dtype=jnp.int32)[:, None]
    lane_q = jnp.arange(s * cin, dtype=jnp.int32)[None, :] // cin
    pcol = rcol * s + lane_q
    colmask = jnp.logical_and(pcol >= 1, pcol <= w).astype(jnp.float32)
    sc2d = colmask * jnp.tile(scale.astype(jnp.float32), (1, s))
    bs2d = colmask * jnp.tile(bias.astype(jnp.float32), (1, s))

    in_specs = [pl.BlockSpec((1, s * th, wr, s * cin),
                             lambda ni, ji: (ni, ji, 0, 0))]
    args = [xr]
    if s == 1:
        in_specs += [
            pl.BlockSpec((1, 1, wr, s * cin), lambda ni, ji: (ni, th * ji + th, 0, 0)),
            pl.BlockSpec((1, 1, wr, s * cin), lambda ni, ji: (ni, th * ji + th + 1, 0, 0)),
        ]
        args += [xr, xr]
    else:
        in_specs += [
            pl.BlockSpec((1, 1, wr, s * cin),
                         lambda ni, ji: (ni, s * th * (ji + 1), 0, 0)),
        ]
        args += [xr]
    in_specs += [pl.BlockSpec((wr, s * cin), lambda ni, ji: (0, 0)),
                 pl.BlockSpec((wr, s * cin), lambda ni, ji: (0, 0)),
                 pl.BlockSpec((3, 3, cin, cout), lambda ni, ji: (0, 0, 0, 0))]
    args += [sc2d, bs2d, w_bf16]
    # TODO(synk): the grid-invariant weight block could be single-buffered
    # (pipeline_mode=pl.Buffered(1)) to save VMEM headroom on v7x.
    if shortcut_w is not None:
        in_specs.append(pl.BlockSpec((cin, cout), lambda ni, ji: (0, 0)))
        args.append(shortcut_w)
    if residual is not None:
        if residual.shape[1] != ho_p:
            residual = jnp.pad(residual, ((0, 0), (0, ho_p - residual.shape[1]),
                                          (0, 0), (0, 0)))
        in_specs.append(pl.BlockSpec((1, th, wo, cout), lambda ni, ji: (ni, ji, 0, 0)))
        args.append(residual)

    out_shapes = [jax.ShapeDtypeStruct((n, ho_p, wo, cout), jnp.bfloat16)]
    out_specs = [pl.BlockSpec((1, th, wo, cout), lambda ni, ji: (ni, ji, 0, 0))]
    if shortcut_w is not None:
        out_shapes.append(jax.ShapeDtypeStruct((n, ho_p, wo, cout), jnp.bfloat16))
        out_specs.append(pl.BlockSpec((1, th, wo, cout), lambda ni, ji: (ni, ji, 0, 0)))
    out_shapes.append(jax.ShapeDtypeStruct((n, nj, 2, cout), jnp.float32))
    out_specs.append(pl.BlockSpec((1, 1, 2, cout), lambda ni, ji: (ni, ji, 0, 0)))

    kernel = _make_conv_kernel(s, th, nj, wr, wo, h, ho, cin, cout,
                               shortcut_w is not None, residual is not None)
    scr_rows = (th + 3) * wr
    results = pl.pallas_call(
        kernel,
        out_shape=tuple(out_shapes),
        grid=(n, nj),
        in_specs=in_specs,
        out_specs=tuple(out_specs),
        scratch_shapes=[pltpu.VMEM((s, scr_rows, s * cin), jnp.bfloat16)],
        compiler_params=pltpu.CompilerParams(
            dimension_semantics=("parallel", "parallel"),
            vmem_limit_bytes=_VMEM_LIMIT),
    )(*args)

    out = results[0]
    short = results[1] if shortcut_w is not None else None
    stats = results[-1]
    sums = stats[:, :, 0, :].sum(axis=(0, 1))
    ssqs = stats[:, :, 1, :].sum(axis=(0, 1))
    if ho_p != ho:
        out = out[:, :ho]
        if short is not None:
            short = short[:, :ho]
    return out, short, sums, ssqs


# ----------------------------------- block wiring ---------------------------------------

def _prep_layer(p):
    """Pad weights / BN params to lane-multiples; convert GEMM operands to bf16."""
    cin = p["conv1_w"].shape[2]
    cout = p["conv1_w"].shape[3]
    cin_p = _round_up(cin, LANE)
    cout_p = _round_up(cout, LANE)
    stride = p["stride"]
    equal = p["equal_in_out"]
    assert not (equal and stride != 1), "identity shortcut requires stride 1"

    def pad_vec(v, size):
        return _pad_last(v.astype(jnp.float32).reshape(-1), size)

    def pad_w(wgt, ci, co):
        wgt = jnp.pad(wgt, ((0, 0), (0, 0), (0, ci - wgt.shape[2]),
                            (0, co - wgt.shape[3])))
        return wgt.astype(jnp.bfloat16)

    out = {
        "stride": stride,
        "equal_in_out": equal,
        "g1": pad_vec(p["bn1_gamma"], cin_p),
        "b1": pad_vec(p["bn1_beta"], cin_p),
        "g2": pad_vec(p["bn2_gamma"], cout_p),
        "b2": pad_vec(p["bn2_beta"], cout_p),
        "w1": pad_w(p["conv1_w"], cin_p, cout_p),
        "w2": pad_w(p["conv2_w"], cout_p, cout_p),
    }
    if not equal:
        ws = jnp.pad(p["shortcut_w"], ((0, cin_p - p["shortcut_w"].shape[0]),
                                       (0, cout_p - p["shortcut_w"].shape[1])))
        out["ws"] = ws.astype(jnp.bfloat16)
    return out


def basic_block_forward(p, x, in_sums, in_ssqs, in_count):
    """Pre-activation WideResNet BasicBlock: BN-ReLU-conv3x3(stride) -> BN-ReLU-conv3x3
    + (identity | BN-ReLU-1x1 shortcut).  Training-mode batch statistics.
    Returns (out, sums, ssqs, count) where the stats are of `out` (the next BN1 input)."""
    stride = p["stride"]
    equal = p["equal_in_out"]
    n, h, w, _ = x.shape

    scale1, bias1 = bn_scale_bias(in_sums, in_ssqs, in_count, p["g1"], p["b1"])
    out1, short, s1, ss1 = conv3x3_bn_relu(
        x, scale1, bias1, p["w1"], stride,
        shortcut_w=None if equal else p["ws"])

    ho = (h - 1) // stride + 1
    wo = (w - 1) // stride + 1
    cnt = n * ho * wo
    scale2, bias2 = bn_scale_bias(s1, ss1, cnt, p["g2"], p["b2"])

    residual = x if equal else short
    # TODO(synk): F.dropout between relu2 and conv2 (drop_rate > 0) not implemented;
    # the reference configuration uses drop_rate == 0.0 so it is a no-op here.
    out2, _, s2, ss2 = conv3x3_bn_relu(
        out1, scale2, bias2, p["w2"], 1, residual=residual)
    return out2, s2, ss2, cnt


def network_block_forward(params, x_nchw):
    x = jnp.transpose(x_nchw, (0, 2, 3, 1))                       # NCHW -> NHWC
    x = _pad_last(x, _round_up(x.shape[-1], LANE)).astype(jnp.bfloat16)
    n, h, w, _ = x.shape
    sums, ssqs = bn_stats(x)                                      # only standalone stats pass
    count = n * h * w
    for p in params:
        pp = _prep_layer(p)
        x, sums, ssqs, count = basic_block_forward(pp, x, sums, ssqs, count)
    out_planes = params[-1]["conv2_w"].shape[-1]
    x = x[..., :out_planes].astype(jnp.float32)
    return jnp.transpose(x, (0, 3, 1, 2))                         # NHWC -> NCHW


def init_network_block(key, nb_layers, in_planes, out_planes, stride):
    params = []
    for i in range(int(nb_layers)):
        key, *ks = jax.random.split(key, 8)
        ip = in_planes if i == 0 else out_planes
        st = stride if i == 0 else 1
        equal = (ip == out_planes)
        p = {
            "stride": st,
            "equal_in_out": equal,
            "bn1_gamma": 1.0 + 0.1 * jax.random.normal(ks[0], (ip,), jnp.float32),
            "bn1_beta": 0.1 * jax.random.normal(ks[1], (ip,), jnp.float32),
            "conv1_w": jax.random.normal(ks[2], (3, 3, ip, out_planes), jnp.float32)
                       * jnp.sqrt(2.0 / (9 * out_planes)),
            "bn2_gamma": 1.0 + 0.1 * jax.random.normal(ks[3], (out_planes,), jnp.float32),
            "bn2_beta": 0.1 * jax.random.normal(ks[4], (out_planes,), jnp.float32),
            "conv2_w": jax.random.normal(ks[5], (3, 3, out_planes, out_planes), jnp.float32)
                       * jnp.sqrt(2.0 / (9 * out_planes)),
        }
        if not equal:
            p["shortcut_w"] = jax.random.normal(ks[6], (ip, out_planes), jnp.float32) \
                              * jnp.sqrt(2.0 / out_planes)
        params.append(p)
    return params


if __name__ == "__main__":
    nb_layers, in_planes, out_planes, stride, drop_rate = 2, 4, 8, 2, 0.0
    key = jax.random.PRNGKey(0)
    kx, kp = jax.random.split(key)
    x = jax.random.normal(kx, (2, in_planes, 16, 16), jnp.float32)   # NCHW input
    params = init_network_block(kp, nb_layers, in_planes, out_planes, stride)
    y = network_block_forward(params, x)
    y = jax.block_until_ready(y)
    assert y.shape == (2, out_planes, 8, 8), y.shape
    assert bool(jnp.isfinite(y).all())
    print("KERNEL_OK")
</pallas_src>

<mosaic_0001>
module attributes {stable_mosaic.version = 11 : i64} {
  func.func @_bn_stats_kernel(%arg0: i32, %arg1: memref<1x256x128xbf16, #tpu.memory_space<vmem>>, %arg2: memref<1x2x128xf32, #tpu.memory_space<vmem>>) attributes {dimension_semantics = [#tpu.dimension_semantics<parallel>], iteration_bounds = array<i64: 2>, scalar_prefetch = 0 : i64, scratch_operands = 0 : i64, tpu.core_type = #tpu.core_type<tc>, window_params = [{transform_indices = @transform_0, window_bounds = array<i64: 1, 256, 128>}, {transform_indices = @transform_1, window_bounds = array<i64: 1, 2, 128>}]} {
    %c0 = arith.constant 0 : index
    %c0_0 = arith.constant 0 : index
    %c0_1 = arith.constant 0 : index
    %0 = vector.load %arg1[%c0, %c0_0, %c0_1] : memref<1x256x128xbf16, #tpu.memory_space<vmem>>, vector<1x256x128xbf16>
    %1 = vector.shape_cast %0 : vector<1x256x128xbf16> to vector<256x128xbf16>
    %2 = arith.extf %1 : vector<256x128xbf16> to vector<256x128xf32>
    %cst = arith.constant dense<0.000000e+00> : vector<128xf32>
    %3 = vector.multi_reduction <add>, %2, %cst [0] : vector<256x128xf32> to vector<128xf32>
    %4 = vector.shape_cast %3 : vector<128xf32> to vector<1x128xf32>
    %5 = arith.mulf %2, %2 : vector<256x128xf32>
    %cst_2 = arith.constant dense<0.000000e+00> : vector<128xf32>
    %6 = vector.multi_reduction <add>, %5, %cst_2 [0] : vector<256x128xf32> to vector<128xf32>
    %7 = vector.shape_cast %6 : vector<128xf32> to vector<1x128xf32>
    %8 = tpu.concatenate %4, %7 in 0 : vector<1x128xf32>, vector<1x128xf32> -> vector<2x128xf32>
    %c0_3 = arith.constant 0 : index
    %c0_4 = arith.constant 0 : index
    %c0_5 = arith.constant 0 : index
    %9 = vector.load %arg2[%c0_3, %c0_4, %c0_5] : memref<1x2x128xf32, #tpu.memory_space<vmem>>, vector<1x2x128xf32>
    %10 = vector.shape_cast %9 : vector<1x2x128xf32> to vector<2x128xf32>
    %11 = vector.shape_cast %8 : vector<2x128xf32> to vector<1x2x128xf32>
    tpu.vector_store %arg2[%c0_3, %c0_4, %c0_5], %11 {strides = array<i32>} : memref<1x2x128xf32, #tpu.memory_space<vmem>>, vector<1x2x128xf32>,
    return
  }
  func.func @transform_0(%arg0: i32) -> (i32, i32, i32) {
    %c0_i32 = arith.constant 0 : i32
    %c0_i32_0 = arith.constant 0 : i32
    %c0_i32_1 = arith.constant 0 : i32
    return %arg0, %c0_i32, %c0_i32_0 : i32, i32, i32
  }
  func.func @transform_1(%arg0: i32) -> (i32, i32, i32) {
    %c0_i32 = arith.constant 0 : i32
    %c0_i32_0 = arith.constant 0 : i32
    %c0_i32_1 = arith.constant 0 : i32
    return %arg0, %c0_i32, %c0_i32_0 : i32, i32, i32
  }
}

</mosaic_0001>

<llo_original>
// kernel: tpu_custom_call.1
$region0: #{tpu_custom_call.1}
  #allocation0 [shape = 'u32[]', space=smem, size = 0x4, offset = 0x4, fixed_abs, tag = 'smem constant byte address 0x4 - core index']
  #allocation1 [shape = 'u32[144,128]{1,0:T(1,128)}', space=vmem, size = 0x12000, scoped, tag = 'internal scratch']
  %s0 = inlined_call_operand.hbm [shape: bf16[2,256,128], index: 0, kind: input, shape index: {}]
  %s1 = inlined_call_operand.hbm [shape: f32[2,2,128], index: 1, kind: output, shape index: {}]
  %s2 = sld [smem:[#allocation0]]
  $region41: #{tpu_custom_call.1} parent=0
    _
  %s4 = ssub.s32 1, %s2
  %s5 = scalar_select 0, %s4, %s2
  $region1: #{tpu_custom_call.1} parent=0
    #allocation2 [shape = 'u8[131072]{0}', space=vmem, size = 0x20000, scoped, tag = 'input window, operand 0']
    #allocation3 [shape = 's32[2]{0}', space=sflag, size = 0x8, scoped, tag = 'scoped memory for tpu_custom_call.1']
    #allocation4 [shape = 's32[2]{0}', space=sflag, size = 0x8, scoped, tag = 'scoped memory for tpu_custom_call.1']
    #allocation5 [shape = 'u8[2048]{0}', space=vmem, size = 0x800, scoped, tag = 'output window, operand 0']
    %6 = vsyncpa [#allocation3], 0
    %s7 = scalar_lea.sflag [#allocation3], 1
    %8 = vsyncpa %s7, 0
    %9 = vsyncpa [#allocation4], 0
    %s10 = scalar_lea.sflag [#allocation4], 1
    %11 = vsyncpa %s10, 0
    loop: start=0, step=1, limit=4
    $region2: #{tpu_custom_call.1} parent=1 // loop_pre_header
      _
    $region3: #{tpu_custom_call.1} parent=1 // loop_header
      %s13 = sphi 0, %s17
      %p14 = scmp.ge.s32.totalorder %s13, 4
      %s23 = sphi 0, %s25
      %s26 = sphi 0, %s23
      %s27 = sphi 0, %s26
      %s43 = sphi 0, %s27
      %s49 = sphi 0, %s51
      %s52 = sphi 0, %s49
      %s53 = sphi 0, %s52
      %s69 = sphi 0, %s53
    $region4: #{tpu_custom_call.1} parent=1 // loop_header_branch
      %16 = sbr.rel (%p14) target = $region8
    $region5: #{tpu_custom_call.1} parent=1 // loop_body
      %s18 = ssub.s32 %s13, 1
      %s19 = ssub.s32 %s13, 2
      %s20 = sadd.s32 %s13, 1
      %s21 = ssub.s32 %s13, %s20
      %p22 = scmp.eq.s32.totalorder %s21, 0
      %s24 = sadd.s32 %s23, 1
      %s25 = scalar_select %p22, %s23, %s24
      %p28 = pneg %p22
      %p29 = scmp.eq.s32.totalorder %s13, 1
      %p30 = por %p28, %p29
      %p31 = scmp.ne.s32.totalorder %s23, %s26
      %p32 = scmp.eq.s32.totalorder %s13, 0
      %p33 = por %p31, %p32
      %p34 = scmp.ne.s32.totalorder %s23, %s26
      %p35 = scmp.eq.s32.totalorder %s18, 1
      %p36 = por %p34, %p35
      %p37 = scmp.ne.s32.totalorder %s26, %s27
      %p38 = scmp.eq.s32.totalorder %s18, 0
      %p39 = por %p37, %p38
      %p40 = scmp.ne.s32.totalorder %s26, %s27
      %p41 = scmp.eq.s32.totalorder %s19, 1
      %p42 = por %p40, %p41
      %p44 = scmp.ne.s32.totalorder %s27, %s43
      %p45 = scmp.eq.s32.totalorder %s19, 0
      %p46 = por %p44, %p45
      %s47 = ssub.s32 %s13, %s20
      %p48 = scmp.eq.s32.totalorder %s47, 0
      %s50 = sadd.s32 %s49, 1
      %s51 = scalar_select %p48, %s49, %s50
      %p54 = pneg %p48
      %p55 = scmp.eq.s32.totalorder %s13, 1
      %p56 = por %p54, %p55
      %p57 = scmp.ne.s32.totalorder %s49, %s52
      %p58 = scmp.eq.s32.totalorder %s13, 0
      %p59 = por %p57, %p58
      %p60 = scmp.ne.s32.totalorder %s49, %s52
      %p61 = scmp.eq.s32.totalorder %s18, 1
      %p62 = por %p60, %p61
      %p63 = scmp.ne.s32.totalorder %s52, %s53
      %p64 = scmp.eq.s32.totalorder %s18, 0
      %p65 = por %p63, %p64
      %p66 = scmp.ne.s32.totalorder %s52, %s53
      %p67 = scmp.eq.s32.totalorder %s19, 1
      %p68 = por %p66, %p67
      %p70 = scmp.ne.s32.totalorder %s53, %s69
      %p71 = scmp.eq.s32.totalorder %s19, 0
      %p72 = por %p70, %p71
      %p73 = scmp.le.s32.totalorder 1, %s13
      %p74 = scmp.lt.s32.totalorder %s13, 3
      %p75 = pnand %p73, %p74
      %p76 = pneg %p75
      // Predicated region
      $region9: #{tpu_custom_call.1} parent=5 // pred_check
        _
      $region10: #{tpu_custom_call.1} parent=5 // pred_check_branch
        %78 = sbr.rel (%p75) target = $region12
      $region11: #{tpu_custom_call.1} parent=5 // pred_region
        %s79 = ssub.s32 %s13, 1
      $region12: #{tpu_custom_call.1} parent=5 // pred_fallthru
        _
      %p80 = scmp.lt.s32.totalorder %s13, 2
      // Predicated region
      $region13: #{tpu_custom_call.1} parent=5 // pred_check
        %p81 = pneg %p80
      $region14: #{tpu_custom_call.1} parent=5 // pred_check_branch
        %83 = sbr.rel (%p81) target = $region16
      $region15: #{tpu_custom_call.1} parent=5 // pred_region
        // Predicated region
        $region17: #{tpu_custom_call.1} parent=15 // pred_check
          %p84 = pneg %p33
        $region18: #{tpu_custom_call.1} parent=15 // pred_check_branch
          %86 = sbr.rel (%p84) target = $region20
        $region19: #{tpu_custom_call.1} parent=15 // pred_region
          %s87 = sand.u32 %s23, 1
          %s88 = scalar_lea.sflag [#allocation3], %s87
          %s89 = sand.u32 %s23, 1
          %s90 = smul.addr %s89, 128
          %s91 = scalar_lea.vmem [#allocation2], %s90
          %s93 = ssub.s32 2048, 2048
          %94 = vsyncadd %s88, %s93
          %s95 = smul.addr %s13, 32
          %s96 = smul.addr %s95, 64
          %s97 = scalar_lea.hbm %s0, %s96
          %s98 = sshll.u32 %s91, 4
          %s99 = int_to_ptr.vmem [resolvable:$true] %s98
          %104 = dma.hbm_to_vmem [thread:$0]  %s97, 2048, %s99, %s88, 64, 64, 4
        $region20: #{tpu_custom_call.1} parent=15 // pred_fallthru
          _
      $region16: #{tpu_custom_call.1} parent=5 // pred_fallthru
        _
      %p105 = scmp.le.s32.totalorder 1, %s13
      %p106 = scmp.lt.s32.totalorder %s13, 3
      %p107 = pnand %p105, %p106
      %p108 = pneg %p107
      // Predicated region
      $region21: #{tpu_custom_call.1} parent=5 // pred_check
        _
      $region22: #{tpu_custom_call.1} parent=5 // pred_check_branch
        %110 = sbr.rel (%p107) target = $region24
      $region23: #{tpu_custom_call.1} parent=5 // pred_region
        %s111 = ssub.s32 %s13, 1
        %s112 = sand.u32 %s26, 1
        %s113 = scalar_lea.sflag [#allocation3], %s112
        %s114 = sand.u32 %s26, 1
        %s115 = smul.addr %s114, 128
        %s116 = scalar_lea.vmem [#allocation2], %s115
        // Predicated region
        $region25: #{tpu_custom_call.1} parent=23 // pred_check
          %p117 = pneg %p39
        $region26: #{tpu_custom_call.1} parent=23 // pred_check_branch
          %119 = sbr.rel (%p117) target = $region28
        $region27: #{tpu_custom_call.1} parent=23 // pred_region
          %120 = dma.done %s113, 2048
        $region28: #{tpu_custom_call.1} parent=23 // pred_fallthru
          _
        %s121 = sand.u32 %s26, 1
        %s122 = scalar_lea.sflag [#allocation3], %s121
        %s123 = sand.u32 %s26, 1
        %s124 = smul.addr %s123, 128
        %s125 = scalar_lea.vmem [#allocation2], %s124
        %p126 = pneg %p39
        %p127 = pneg %p36
        %p128 = pneg %p65
        %p129 = pneg %p62
        %s130 = sand.u32 %s52, 1
        %s131 = scalar_lea.sflag [#allocation4], %s130
        %s132 = sand.u32 %s52, 1
        %s133 = smul.addr %s132, 2
        %s134 = scalar_lea.vmem [#allocation5], %s133
        %v135 = vld [vmem:[%s116] sm:$0xf]
        %v136 = vld [vmem:[%s116 + $0x4] sm:$0xf]
        %v137 = vld [vmem:[%s116 + $0x8] sm:$0xf]
        %v138 = vld [vmem:[%s116 + $0xc] sm:$0xf]
        %v139 = vld [vmem:[%s116 + $0x10] sm:$0xf]
        %v140 = vld [vmem:[%s116 + $0x14] sm:$0xf]
        %v141 = vld [vmem:[%s116 + $0x18] sm:$0xf]
        %v142 = vld [vmem:[%s116 + $0x1c] sm:$0xf]
        %v143 = vld [vmem:[%s116 + $0x20] sm:$0xf]
        %v144 = vld [vmem:[%s116 + $0x24] sm:$0xf]
        %v145 = vld [vmem:[%s116 + $0x28] sm:$0xf]
        %v146 = vld [vmem:[%s116 + $0x2c] sm:$0xf]
        %v147 = vld [vmem:[%s116 + $0x30] sm:$0xf]
        %v148 = vld [vmem:[%s116 + $0x34] sm:$0xf]
        %v149 = vld [vmem:[%s116 + $0x38] sm:$0xf]
        %v150 = vld [vmem:[%s116 + $0x3c] sm:$0xf]
        %v151 = vld [vmem:[%s116 + $0x40] sm:$0xf]
        %v152 = vld [vmem:[%s116 + $0x44] sm:$0xf]
        %v153 = vld [vmem:[%s116 + $0x48] sm:$0xf]
        %v154 = vld [vmem:[%s116 + $0x4c] sm:$0xf]
        %v155 = vld [vmem:[%s116 + $0x50] sm:$0xf]
        %v156 = vld [vmem:[%s116 + $0x54] sm:$0xf]
        %v157 = vld [vmem:[%s116 + $0x58] sm:$0xf]
        %v158 = vld [vmem:[%s116 + $0x5c] sm:$0xf]
        %v159 = vld [vmem:[%s116 + $0x60] sm:$0xf]
        %v160 = vld [vmem:[%s116 + $0x64] sm:$0xf]
        %v161 = vld [vmem:[%s116 + $0x68] sm:$0xf]
        %v162 = vld [vmem:[%s116 + $0x6c] sm:$0xf]
        %v163 = vld [vmem:[%s116 + $0x70] sm:$0xf]
        %v164 = vld [vmem:[%s116 + $0x74] sm:$0xf]
        %v165 = vld [vmem:[%s116 + $0x78] sm:$0xf]
        %v166 = vld [vmem:[%s116 + $0x7c] sm:$0xf]
        %v167 = vunpack.c.l.bf16 %v135
        %v168 = vunpack.c.l.bf16 %v136
        %v169 = vunpack.c.l.bf16 %v137
        %v170 = vunpack.c.l.bf16 %v138
        %v171 = vunpack.c.l.bf16 %v139
        %v172 = vunpack.c.l.bf16 %v140
        %v173 = vunpack.c.l.bf16 %v141
        %v174 = vunpack.c.l.bf16 %v142
        %v175 = vunpack.c.l.bf16 %v143
        %v176 = vunpack.c.l.bf16 %v144
        %v177 = vunpack.c.l.bf16 %v145
        %v178 = vunpack.c.l.bf16 %v146
        %v179 = vunpack.c.l.bf16 %v147
        %v180 = vunpack.c.l.bf16 %v148
        %v181 = vunpack.c.l.bf16 %v149
        %v182 = vunpack.c.l.bf16 %v150
        %v183 = vunpack.c.l.bf16 %v151
        %v184 = vunpack.c.l.bf16 %v152
        %v185 = vunpack.c.l.bf16 %v153
        %v186 = vunpack.c.l.bf16 %v154
        %v187 = vunpack.c.l.bf16 %v155
        %v188 = vunpack.c.l.bf16 %v156
        %v189 = vunpack.c.l.bf16 %v157
        %v190 = vunpack.c.l.bf16 %v158
        %v191 = vunpack.c.l.bf16 %v159
        %v192 = vunpack.c.l.bf16 %v160
        %v193 = vunpack.c.l.bf16 %v161
        %v194 = vunpack.c.l.bf16 %v162
        %v195 = vunpack.c.l.bf16 %v163
        %v196 = vunpack.c.l.bf16 %v164
        %v197 = vunpack.c.l.bf16 %v165
        %v198 = vunpack.c.l.bf16 %v166
        %v199 = vadd.f32 %v167, %v168
        %v200 = vadd.f32 %v199, %v169
        %v201 = vadd.f32 %v200, %v170
        %v202 = vadd.f32 %v201, %v171
        %v203 = vadd.f32 %v202, %v172
        %v204 = vadd.f32 %v203, %v173
        %v205 = vadd.f32 %v204, %v174
        %v206 = vadd.f32 %v205, %v175
        %v207 = vadd.f32 %v206, %v176
        %v208 = vadd.f32 %v207, %v177
        %v209 = vadd.f32 %v208, %v178
        %v210 = vadd.f32 %v209, %v179
        %v211 = vadd.f32 %v210, %v180
        %v212 = vadd.f32 %v211, %v181
        %v213 = vadd.f32 %v212, %v182
        %v214 = vadd.f32 %v213, %v183
        %v215 = vadd.f32 %v214, %v184
        %v216 = vadd.f32 %v215, %v185
        %v217 = vadd.f32 %v216, %v186
        %v218 = vadd.f32 %v217, %v187
        %v219 = vadd.f32 %v218, %v188
        %v220 = vadd.f32 %v219, %v189
        %v221 = vadd.f32 %v220, %v190
        %v222 = vadd.f32 %v221, %v191
        %v223 = vadd.f32 %v222, %v192
        %v224 = vadd.f32 %v223, %v193
        %v225 = vadd.f32 %v224, %v194
        %v226 = vadd.f32 %v225, %v195
        %v227 = vadd.f32 %v226, %v196
        %v228 = vadd.f32 %v227, %v197
        %v229 = vadd.f32 %v228, %v198
        %v230 = vrot.slane %v229, 4
        %v231 = vadd.f32 %v229, %v230
        %v232 = vrot.slane %v231, 2
        %v233 = vadd.f32 %v231, %v232
        %v234 = vrot.slane %v233, 1
        %v235 = vadd.f32 %v233, %v234
        %v236 = vmul.f32 %v167, %v167
        %v237 = vmul.f32 %v168, %v168
        %v238 = vmul.f32 %v169, %v169
        %v239 = vmul.f32 %v170, %v170
        %v240 = vmul.f32 %v171, %v171
        %v241 = vmul.f32 %v172, %v172
        %v242 = vmul.f32 %v173, %v173
        %v243 = vmul.f32 %v174, %v174
        %v244 = vmul.f32 %v175, %v175
        %v245 = vmul.f32 %v176, %v176
        %v246 = vmul.f32 %v177, %v177
        %v247 = vmul.f32 %v178, %v178
        %v248 = vmul.f32 %v179, %v179
        %v249 = vmul.f32 %v180, %v180
        %v250 = vmul.f32 %v181, %v181
        %v251 = vmul.f32 %v182, %v182
        %v252 = vmul.f32 %v183, %v183
        %v253 = vmul.f32 %v184, %v184
        %v254 = vmul.f32 %v185, %v185
        %v255 = vmul.f32 %v186, %v186
        %v256 = vmul.f32 %v187, %v187
        %v257 = vmul.f32 %v188, %v188
        %v258 = vmul.f32 %v189, %v189
        %v259 = vmul.f32 %v190, %v190
        %v260 = vmul.f32 %v191, %v191
        %v261 = vmul.f32 %v192, %v192
        %v262 = vmul.f32 %v193, %v193
        %v263 = vmul.f32 %v194, %v194
        %v264 = vmul.f32 %v195, %v195
        %v265 = vmul.f32 %v196, %v196
        %v266 = vmul.f32 %v197, %v197
        %v267 = vmul.f32 %v198, %v198
        %v268 = vadd.f32 %v236, %v237
        %v269 = vadd.f32 %v268, %v238
        %v270 = vadd.f32 %v269, %v239
        %v271 = vadd.f32 %v270, %v240
        %v272 = vadd.f32 %v271, %v241
        %v273 = vadd.f32 %v272, %v242
        %v274 = vadd.f32 %v273, %v243
        %v275 = vadd.f32 %v274, %v244
        %v276 = vadd.f32 %v275, %v245
        %v277 = vadd.f32 %v276, %v246
        %v278 = vadd.f32 %v277, %v247
        %v279 = vadd.f32 %v278, %v248
        %v280 = vadd.f32 %v279, %v249
        %v281 = vadd.f32 %v280, %v250
        %v282 = vadd.f32 %v281, %v251
        %v283 = vadd.f32 %v282, %v252
        %v284 = vadd.f32 %v283, %v253
        %v285 = vadd.f32 %v284, %v254
        %v286 = vadd.f32 %v285, %v255
        %v287 = vadd.f32 %v286, %v256
        %v288 = vadd.f32 %v287, %v257
        %v289 = vadd.f32 %v288, %v258
        %v290 = vadd.f32 %v289, %v259
        %v291 = vadd.f32 %v290, %v260
        %v292 = vadd.f32 %v291, %v261
        %v293 = vadd.f32 %v292, %v262
        %v294 = vadd.f32 %v293, %v263
        %v295 = vadd.f32 %v294, %v264
        %v296 = vadd.f32 %v295, %v265
        %v297 = vadd.f32 %v296, %v266
        %v298 = vadd.f32 %v297, %v267
        %v299 = vrot.slane %v298, 4
        %v300 = vadd.f32 %v298, %v299
        %v301 = vrot.slane %v300, 2
        %v302 = vadd.f32 %v300, %v301
        %v303 = vrot.slane %v302, 1
        %v304 = vadd.f32 %v302, %v303
        %vm305 = vcmask 1040384
        %v306 = vsel %vm305, %v235, %v304
        %307 = vst [vmem:[%s134] sm:$0x3] %v306
        %s308 = sand.u32 %s52, 1
        %s309 = scalar_lea.sflag [#allocation4], %s308
        %s310 = sand.u32 %s52, 1
        %s311 = smul.addr %s310, 2
        %s312 = scalar_lea.vmem [#allocation5], %s311
        // Predicated region
        $region29: #{tpu_custom_call.1} parent=23 // pred_check
          %p313 = pneg %p62
        $region30: #{tpu_custom_call.1} parent=23 // pred_check_branch
          %315 = sbr.rel (%p313) target = $region32
        $region31: #{tpu_custom_call.1} parent=23 // pred_region
          %s317 = ssub.s32 32, 32
          %318 = vsyncadd %s309, %s317
          %s319 = smul.addr %s18, 32
          %s320 = scalar_lea.hbm %s1, %s319
          %s322 = sshll.u32 %s312, 4
          %s323 = int_to_ptr.vmem [resolvable:$true] %s322
          %325 = dma.vmem_to_hbm [thread:$0]  %s323, 32, %s320, %s309
        $region32: #{tpu_custom_call.1} parent=23 // pred_fallthru
          _
      $region24: #{tpu_custom_call.1} parent=5 // pred_fallthru
        _
      %p326 = scmp.le.s32.totalorder 2, %s13
      // Predicated region
      $region33: #{tpu_custom_call.1} parent=5 // pred_check
        %p327 = pneg %p326
      $region34: #{tpu_custom_call.1} parent=5 // pred_check_branch
        %329 = sbr.rel (%p327) target = $region36
      $region35: #{tpu_custom_call.1} parent=5 // pred_region
        %s330 = ssub.s32 %s13, 2
        // Predicated region
        $region37: #{tpu_custom_call.1} parent=35 // pred_check
          %p331 = pneg %p68
        $region38: #{tpu_custom_call.1} parent=35 // pred_check_branch
          %333 = sbr.rel (%p331) target = $region40
        $region39: #{tpu_custom_call.1} parent=35 // pred_region
          %s334 = sand.u32 %s53, 1
          %s335 = scalar_lea.sflag [#allocation4], %s334
          %s336 = sand.u32 %s53, 1
          %s337 = smul.addr %s336, 2
          %s338 = scalar_lea.vmem [#allocation5], %s337
          %339 = dma.done %s335, 32
        $region40: #{tpu_custom_call.1} parent=35 // pred_fallthru
          _
      $region36: #{tpu_custom_call.1} parent=5 // pred_fallthru
        _
    $region6: #{tpu_custom_call.1} parent=1 // loop_footer
      %s17 = sadd.s32 1, %s13
    $region7: #{tpu_custom_call.1} parent=1 // loop_footer_branch
      %12 = sbr.rel target = $region3
    $region8: #{tpu_custom_call.1} parent=1 // loop_exit
      _
    %340 = vsyncpa [#allocation3], 1
    %s341 = scalar_lea.sflag [#allocation3], 1
    %342 = vsyncpa %s341, 1
    %343 = vsyncpa [#allocation4], 1
    %s344 = scalar_lea.sflag [#allocation4], 1
    %345 = vsyncpa %s344, 1

</llo_original>
